<compile_context>
chip_gen: v7x
topology: tpu7x:2x2x1
jax: 0.10.0
libtpu: 0.0.40
codegen_flags: <defaults>
</compile_context>

<pallas_src>
import math

import jax
import jax.numpy as jnp
from jax.experimental import pallas as pl
from jax.experimental.pallas import tpu as pltpu


# ---------------------------------------------------------------------------
# Kernel body
# ---------------------------------------------------------------------------
def periodic_kernel(x_ref, c_ref, phase_ref, out_ref):
    # x_ref:     (TB, Kdim)   VMEM  batch tile (possibly row-packed) of inputs
    # c_ref:     (Kdim, Ct)   VMEM  block-diagonal coefficient block (2*pi folded in)
    # phase_ref: (1,  Ct)     VMEM  0 for cos columns, pi/2 for sin columns
    # out_ref:   (TB, Ct)     VMEM  lane-dense flattened output tile
    v = jnp.dot(x_ref[...], c_ref[...], preferred_element_type=jnp.float32)
    out_ref[...] = jnp.cos(v - phase_ref[...]).astype(out_ref.dtype)


# ---------------------------------------------------------------------------
# Constant construction
# ---------------------------------------------------------------------------
def make_log_linear_coefficients(n_features: int, n: int, sigma: float):
    # Deterministic 'log-linear' initialization from PeriodicOptions:
    #   coefficients = sigma ** (arange(n) / n), repeated over features.
    row = sigma ** (jnp.arange(n, dtype=jnp.float32) / n)     # (n,)
    return jnp.tile(row[None, :], (n_features, 1))             # (F, n)


def build_periodic_constants(coefficients, *, k=1, feature_tile=None):
    """Build (C, phase) for the matmul formulation.

    coefficients: (F, n)
    k:            batch rows packed per output row (only valid with one feature tile)
    feature_tile: TF features per grid tile (divides F)

    Returns:
      C:     (G*Kdim, Kdim*2n)  stacked per-tile block-diagonal matrices
      phase: (1, Kdim*2n)
    where G = F//TF, Kdim = k*TF.
    """
    coefficients = jnp.asarray(coefficients, jnp.float32)
    F, n = coefficients.shape
    TF = F if feature_tile is None else int(feature_tile)
    assert F % TF == 0
    if k > 1:
        assert TF == F, "row packing requires a single feature tile"
    G = F // TF
    Kdim = k * TF
    two_n = 2 * n
    Ct = Kdim * two_n

    # Global feature index feeding local position m of tile g.
    local = jnp.arange(Kdim) % TF                                # (Kdim,)
    feat = jnp.arange(G)[:, None] * TF + local[None, :]          # (G, Kdim)
    coef = coefficients[feat]                                    # (G, Kdim, n)
    band = (2.0 * jnp.pi) * jnp.concatenate([coef, coef], -1)    # (G, Kdim, 2n)
    eye = jnp.eye(Kdim, dtype=jnp.float32)
    # C[g, i, j*2n + t] = (i == j) * band[g, j, t]
    C = (eye[None, :, :, None] * band[:, None, :, :]).reshape(G * Kdim, Ct)

    phase_band = jnp.concatenate(
        [jnp.zeros((n,), jnp.float32), jnp.full((n,), jnp.pi / 2.0, jnp.float32)])
    phase = jnp.tile(phase_band, (Kdim,)).reshape(1, Ct)
    return C, phase


# ---------------------------------------------------------------------------
# Tiling heuristics
# ---------------------------------------------------------------------------
def _choose_row_pack(B, F, n, *, max_packed_c_bytes=2 << 20):
    """Pack k batch rows per output row so the output width is a 128-lane multiple."""
    cols = F * 2 * n
    if cols % 128 == 0:
        return 1
    k = 128 // math.gcd(cols, 128)
    if k <= 1 or B % k != 0:
        return 1
    if (k * F) * (k * cols) * 4 > max_packed_c_bytes:
        return 1          # packed block-diagonal C would be too large
    return k


def _choose_feature_tile(F, n, c_block_budget_bytes):
    """Pick TF (divides F, multiple of 128) so the C block stays under budget."""
    cols = F * 2 * n
    if F * cols * 4 <= c_block_budget_bytes:
        return F                                   # dense C fits comfortably
    best = None
    tf = 128
    while tf < F:                                  # x-tile last dim must be 128-aligned
        if F % tf == 0 and tf * (tf * 2 * n) * 4 <= c_block_budget_bytes:
            best = tf                              # largest fitting multiple of 128
        tf += 128
    if best is not None:
        return best
    tf = 128
    while tf < F:
        if F % tf == 0:
            return tf                              # smallest valid tile (over budget)
        tf += 128
    return F                                       # F not tileable; fall back to dense


def _choose_batch_tile(R, Kdim, Ct, out_bytes, c_bufs, vmem_budget_bytes,
                       ensure_two_steps, max_rows=8192):
    """VMEM-driven batch-tile size, accounting for resident constants."""
    # Resident constants: C (single- or double-buffered) + phase (padded to 8 sublanes)
    fixed = c_bufs * Kdim * Ct * 4 + 8 * Ct * 4 + (1 << 20)   # + 1 MiB slack
    per_row = 2 * (4 * Kdim + out_bytes * Ct)                 # double-buffered x + out
    avail = max(vmem_budget_bytes - fixed, 8 * per_row)
    tb = int(avail // per_row)
    tb = max((tb // 8) * 8, 8)
    tb = min(tb, max_rows)
    if ensure_two_steps and R >= 16:
        # >=2 grid steps so dimension_semantics=("parallel",...) can use both v7x TCs.
        half = ((pl.cdiv(R, 2) + 7) // 8) * 8
        tb = min(tb, half)
    return R if R <= tb else tb


def _resident_spec(block_shape, index_map):
    """BlockSpec for an operand whose block index never changes across the grid:
    single-buffer it (halves its VMEM footprint). Falls back silently if the
    running JAX version does not support pipeline_mode."""
    try:
        return pl.BlockSpec(block_shape, index_map, pipeline_mode=pl.Buffered(1))
    except Exception:  # pragma: no cover - older API
        return pl.BlockSpec(block_shape, index_map)


# ---------------------------------------------------------------------------
# Wrapper
# ---------------------------------------------------------------------------
def periodic_forward(x, coefficients, *, out_dtype=None, batch_tile=None,
                     vmem_budget_bytes=32 << 20,
                     c_block_budget_bytes=4 << 20,
                     ensure_two_grid_steps=True):
    """x: (B, F), coefficients: (F, n)  ->  (B, F, 2n).

    out_dtype defaults to x.dtype (module semantics). The kernel is HBM-write
    bound; pass out_dtype=jnp.bfloat16 when the consumer tolerates it.
    """
    x = jnp.asarray(x, jnp.float32)
    coefficients = jnp.asarray(coefficients, jnp.float32)
    B, F = x.shape
    Fc, n = coefficients.shape
    assert F == Fc
    two_n = 2 * n
    cols = F * two_n
    out_dtype = x.dtype if out_dtype is None else jnp.dtype(out_dtype)
    out_bytes = jnp.dtype(out_dtype).itemsize

    # --- layout parameters --------------------------------------------------
    k = _choose_row_pack(B, F, n)                 # lane-density for small F*2n
    TF = F if k > 1 else _choose_feature_tile(F, n, c_block_budget_bytes)
    G = F // TF                                   # feature tiles
    Kdim = k * TF                                 # matmul K dim per tile
    Ct = Kdim * two_n                             # output columns per tile
    R = B // k                                    # output rows

    C, phase = build_periodic_constants(coefficients, k=k, feature_tile=TF)
    c_constant = (G == 1)                         # C block never changes across grid
    c_bufs = 1 if c_constant else 2

    if batch_tile is None:
        TB = _choose_batch_tile(R, Kdim, Ct, out_bytes, c_bufs,
                                vmem_budget_bytes, ensure_two_grid_steps)
    else:
        TB = min(int(batch_tile), R)

    x_eff = x if k == 1 else x.reshape(R, Kdim)   # free row-major reshape
    grid = (pl.cdiv(R, TB), G)

    # Explicit scoped-VMEM limit (v5e default is only 16 MiB; keep <48 MiB for v7x).
    est_vmem = (c_bufs * Kdim * Ct * 4 + 8 * Ct * 4
                + TB * 2 * (4 * Kdim + out_bytes * Ct))
    vmem_limit = int(min(max(est_vmem + (4 << 20), 32 << 20), 48 << 20))

    cost = pl.CostEstimate(
        flops=2 * R * G * Kdim * Ct,
        transcendentals=B * cols,
        bytes_accessed=4 * B * F + 4 * G * Kdim * Ct + 4 * Ct + out_bytes * B * cols,
    )

    x_spec = pl.BlockSpec((TB, Kdim), lambda i, g: (i, g))
    if c_constant:
        c_spec = _resident_spec((Kdim, Ct), lambda i, g: (0, 0))
    else:
        c_spec = pl.BlockSpec((Kdim, Ct), lambda i, g: (g, 0))
    phase_spec = _resident_spec((1, Ct), lambda i, g: (0, 0))
    out_spec = pl.BlockSpec((TB, Ct), lambda i, g: (i, g))

    out_flat = pl.pallas_call(
        periodic_kernel,
        out_shape=jax.ShapeDtypeStruct((R, G * Ct), out_dtype),
        grid=grid,
        in_specs=[x_spec, c_spec, phase_spec],
        out_specs=out_spec,
        compiler_params=pltpu.CompilerParams(
            dimension_semantics=("parallel", "arbitrary"),
            vmem_limit_bytes=vmem_limit,
        ),
        cost_estimate=cost,
    )(x_eff, C, phase)

    # Row-major reshape back to the (B, F, 2n) layout of the PyTorch module (free).
    return out_flat.reshape(B, F, two_n)


def _reference(x, coefficients):
    v = 2.0 * jnp.pi * coefficients[None] * x[..., None]
    return jnp.concatenate([jnp.cos(v), jnp.sin(v)], axis=-1)


if __name__ == "__main__":
    # Shapes implied by the module: batch=2, n_features=4, options.n=8.
    B, F, N = 2, 4, 8
    sigma = 0.05

    key = jax.random.PRNGKey(0)
    x = jax.random.normal(key, (B, F), dtype=jnp.float32)
    coefficients = make_log_linear_coefficients(F, N, sigma)

    out = jax.block_until_ready(periodic_forward(x, coefficients))
    ref = _reference(x, coefficients)
    assert out.shape == (B, F, 2 * N)
    assert out.dtype == x.dtype
    assert jnp.allclose(out, ref, atol=1e-4, rtol=1e-4)

    # Batch-tiled grid + row-packed lane-dense output (cols=64 -> 2 rows / 128 lanes).
    B2 = 64
    x2 = jax.random.normal(jax.random.PRNGKey(1), (B2, F), dtype=jnp.float32)
    out2 = jax.block_until_ready(periodic_forward(x2, coefficients, batch_tile=8))
    ref2 = _reference(x2, coefficients)
    assert out2.shape == (B2, F, 2 * N)
    assert jnp.allclose(out2, ref2, atol=1e-4, rtol=1e-4)

    # bf16 output path (recommended when downstream consumes bf16): halves HBM writes.
    out3 = jax.block_until_ready(
        periodic_forward(x2, coefficients, out_dtype=jnp.bfloat16))
    assert out3.dtype == jnp.bfloat16
    assert jnp.allclose(out3.astype(jnp.float32), ref2, atol=1e-2, rtol=1e-2)

    # Large-F feature-tiled path: C held as per-tile diagonal blocks, 2-D grid.
    B4, F4, N4 = 16, 256, 16
    coef4 = jax.random.normal(jax.random.PRNGKey(2), (F4, N4), dtype=jnp.float32) * sigma
    x4 = jax.random.normal(jax.random.PRNGKey(3), (B4, F4), dtype=jnp.float32)
    out4 = jax.block_until_ready(periodic_forward(x4, coef4))
    ref4 = _reference(x4, coef4)
    assert out4.shape == (B4, F4, 2 * N4)
    assert jnp.allclose(out4, ref4, atol=1e-4, rtol=1e-4)

    print("KERNEL_OK")
</pallas_src>

<mosaic_0001>
module attributes {stable_mosaic.version = 11 : i64} {
  func.func @periodic_kernel(%arg0: i32, %arg1: i32, %arg2: memref<1x8xf32, #tpu.memory_space<vmem>>, %arg3: memref<8x128xf32, #tpu.memory_space<vmem>>, %arg4: memref<1x128xf32, #tpu.memory_space<vmem>>, %arg5: memref<1x128xf32, #tpu.memory_space<vmem>>) attributes {dimension_semantics = [#tpu.dimension_semantics<parallel>, #tpu.dimension_semantics<arbitrary>], iteration_bounds = array<i64: 1, 1>, scalar_prefetch = 0 : i64, scratch_operands = 0 : i64, tpu.core_type = #tpu.core_type<tc>, window_params = [{transform_indices = @transform_0, window_bounds = array<i64: 1, 8>}, {pipeline_mode = #tpu.pipeline_mode<synchronous>, transform_indices = @transform_1, window_bounds = array<i64: 8, 128>}, {pipeline_mode = #tpu.pipeline_mode<synchronous>, transform_indices = @transform_2, window_bounds = array<i64: 1, 128>}, {transform_indices = @transform_3, window_bounds = array<i64: 1, 128>}]} {
    %c0 = arith.constant 0 : index
    %c0_0 = arith.constant 0 : index
    %0 = vector.load %arg2[%c0, %c0_0] : memref<1x8xf32, #tpu.memory_space<vmem>>, vector<1x8xf32>
    %c0_1 = arith.constant 0 : index
    %c0_2 = arith.constant 0 : index
    %1 = vector.load %arg3[%c0_1, %c0_2] : memref<8x128xf32, #tpu.memory_space<vmem>>, vector<8x128xf32>
    %cst = arith.constant dense<0.000000e+00> : vector<1x128xf32>
    %2 = tpu.matmul %0, %1, %cst {dimension_numbers = #tpu.dot_dimension_numbers<[1], [0], [0], [1], [0, 0, 1, 1], [], []>} : vector<1x8xf32>, vector<8x128xf32>, vector<1x128xf32> -> vector<1x128xf32>
    %c0_3 = arith.constant 0 : index
    %c0_4 = arith.constant 0 : index
    %3 = vector.load %arg4[%c0_3, %c0_4] : memref<1x128xf32, #tpu.memory_space<vmem>>, vector<1x128xf32>
    %4 = arith.subf %2, %3 : vector<1x128xf32>
    %5 = math.cos %4 : vector<1x128xf32>
    %c0_5 = arith.constant 0 : index
    %c0_6 = arith.constant 0 : index
    %6 = vector.load %arg5[%c0_5, %c0_6] : memref<1x128xf32, #tpu.memory_space<vmem>>, vector<1x128xf32>
    tpu.vector_store %arg5[%c0_5, %c0_6], %5 {strides = array<i32>} : memref<1x128xf32, #tpu.memory_space<vmem>>, vector<1x128xf32>,
    return
  }
  func.func @transform_0(%arg0: i32, %arg1: i32) -> (i32, i32) {
    %c0_i32 = arith.constant 0 : i32
    return %arg0, %arg1 : i32, i32
  }
  func.func @transform_1(%arg0: i32, %arg1: i32) -> (i32, i32) {
    %c0_i32 = arith.constant 0 : i32
    %c0_i32_0 = arith.constant 0 : i32
    %c0_i32_1 = arith.constant 0 : i32
    return %c0_i32, %c0_i32_0 : i32, i32
  }
  func.func @transform_2(%arg0: i32, %arg1: i32) -> (i32, i32) {
    %c0_i32 = arith.constant 0 : i32
    %c0_i32_0 = arith.constant 0 : i32
    %c0_i32_1 = arith.constant 0 : i32
    return %c0_i32, %c0_i32_0 : i32, i32
  }
  func.func @transform_3(%arg0: i32, %arg1: i32) -> (i32, i32) {
    %c0_i32 = arith.constant 0 : i32
    return %arg0, %arg1 : i32, i32
  }
}

</mosaic_0001>

<llo_original>
// kernel: tpu_custom_call.1
$region0: #{tpu_custom_call.1}
  #allocation0 [shape = 'u32[]', space=smem, size = 0x4, offset = 0x4, fixed_abs, tag = 'smem constant byte address 0x4 - core index']
  #allocation1 [shape = 'u32[144,128]{1,0:T(1,128)}', space=vmem, size = 0x12000, scoped, tag = 'internal scratch']
  %s0 = inlined_call_operand.hbm [shape: f32[1,8], index: 0, kind: input, shape index: {}]
  %s1 = inlined_call_operand.hbm [shape: f32[8,128], index: 1, kind: input, shape index: {}]
  %s2 = inlined_call_operand.vmem [shape: f32[1,128], index: 2, kind: input, shape index: {}]
  %s3 = inlined_call_operand.hbm [shape: f32[1,128], index: 3, kind: output, shape index: {}]
  %s4 = sld [smem:[#allocation0]]
  $region30: #{tpu_custom_call.1} parent=0
    _
  %s6 = ssub.s32 1, %s4
  %s7 = scalar_select 0, %s6, %s4
  $region1: #{tpu_custom_call.1} parent=0
    #allocation2 [shape = 'u8[512]{0}', space=vmem, size = 0x400, scoped, tag = 'input window, operand 0, single buffered']
    #allocation3 [shape = 's32[1]{0}', space=sflag, size = 0x4, scoped, tag = 'scoped memory for tpu_custom_call.1']
    #allocation4 [shape = 's32[1]{0}', space=sflag, size = 0x4, scoped, tag = 'scoped memory for tpu_custom_call.1']
    #allocation5 [shape = 'u8[4096]{0}', space=vmem, size = 0x1000, scoped, tag = 'input window, operand 1, single buffered']
    #allocation6 [shape = 's32[1]{0}', space=sflag, size = 0x4, scoped, tag = 'scoped memory for tpu_custom_call.1']
    #allocation7 [shape = 'u8[512]{0}', space=vmem, size = 0x400, scoped, tag = 'output window, operand 0, single buffered']
    %8 = vsyncpa [#allocation3], 0
    %9 = vsyncpa [#allocation6], 0
    %10 = vsyncpa [#allocation4], 0
    // Predicated region
    $region2: #{tpu_custom_call.1} parent=1 // pred_check
      _
    $region3: #{tpu_custom_call.1} parent=1 // pred_check_branch
      %12 = sbr.rel (0) target = $region5
    $region4: #{tpu_custom_call.1} parent=1 // pred_region
      %s14 = ssub.s32 16, 16
      %15 = vsyncadd [#allocation3], %s14
      %s17 = sshll.u32 [#allocation2], 4
      %s18 = int_to_ptr.vmem [resolvable:$true] %s17
      %20 = dma.hbm_to_vmem [thread:$0]  %s0, 16, %s18, [#allocation3]
    $region5: #{tpu_custom_call.1} parent=1 // pred_fallthru
      _
    // Predicated region
    $region6: #{tpu_custom_call.1} parent=1 // pred_check
      _
    $region7: #{tpu_custom_call.1} parent=1 // pred_check_branch
      %22 = sbr.rel (0) target = $region9
    $region8: #{tpu_custom_call.1} parent=1 // pred_region
      %s24 = ssub.s32 128, 128
      %25 = vsyncadd [#allocation6], %s24
      %s27 = sshll.u32 [#allocation5], 4
      %s28 = int_to_ptr.vmem [resolvable:$true] %s27
      %30 = dma.hbm_to_vmem [thread:$0]  %s1, 128, %s28, [#allocation6]
    $region9: #{tpu_custom_call.1} parent=1 // pred_fallthru
      _
    // Predicated region
    $region10: #{tpu_custom_call.1} parent=1 // pred_check
      _
    $region11: #{tpu_custom_call.1} parent=1 // pred_check_branch
      %32 = sbr.rel (0) target = $region13
    $region12: #{tpu_custom_call.1} parent=1 // pred_region
      _
    $region13: #{tpu_custom_call.1} parent=1 // pred_fallthru
      _
    // Predicated region
    $region14: #{tpu_custom_call.1} parent=1 // pred_check
      _
    $region15: #{tpu_custom_call.1} parent=1 // pred_check_branch
      %34 = sbr.rel (0) target = $region17
    $region16: #{tpu_custom_call.1} parent=1 // pred_region
      %35 = dma.done [#allocation3], 16
    $region17: #{tpu_custom_call.1} parent=1 // pred_fallthru
      _
    // Predicated region
    $region18: #{tpu_custom_call.1} parent=1 // pred_check
      _
    $region19: #{tpu_custom_call.1} parent=1 // pred_check_branch
      %37 = sbr.rel (0) target = $region21
    $region20: #{tpu_custom_call.1} parent=1 // pred_region
      %38 = dma.done [#allocation6], 128
    $region21: #{tpu_custom_call.1} parent=1 // pred_fallthru
      _
    %v39 = vld [vmem:[#allocation2] sm:$0x1]
    %v40 = vld [vmem:[#allocation5] sm:$0xff]
    %vm41 = vcmask 64512
    %v43 = vsel %vm41, %v39, 0
    %45 = vmatprep.subr.mxu0 0.0
    %46 = vmatpush1.msra.mxu0 %v40
    %47 = vmatprep.subr.mxu0 0.0
    %48 = vmatpush1.msra.mxu0 0.0
    %49 = vmatprep.subr.mxu0 0.0
    %50 = vmatpush1.msra.mxu0 0.0
    %51 = vmatprep.subr.mxu0 0.0
    %52 = vmatpush1.msra.mxu0 0.0
    %53 = vmatprep.subr.mxu0 0.0
    %54 = vmatpush1.msra.mxu0 0.0
    %55 = vmatprep.subr.mxu0 0.0
    %56 = vmatpush1.msra.mxu0 0.0
    %57 = vmatprep.subr.mxu0 0.0
    %58 = vmatpush1.msra.mxu0 0.0
    %59 = vmatprep.subr.mxu0 0.0
    %60 = vmatpush1.msra.mxu0 0.0
    %61 = vmatprep.subr.mxu0 0.0
    %62 = vmatpush1.msra.mxu0 0.0
    %63 = vmatprep.subr.mxu0 0.0
    %64 = vmatpush1.msra.mxu0 0.0
    %65 = vmatprep.subr.mxu0 0.0
    %66 = vmatpush1.msra.mxu0 0.0
    %67 = vmatprep.subr.mxu0 0.0
    %68 = vmatpush1.msra.mxu0 0.0
    %69 = vmatprep.subr.mxu0 0.0
    %70 = vmatpush1.msra.mxu0 0.0
    %71 = vmatprep.subr.mxu0 0.0
    %72 = vmatpush1.msra.mxu0 0.0
    %73 = vmatprep.subr.mxu0 0.0
    %74 = vmatpush1.msra.mxu0 0.0
    %75 = vmatprep.subr.mxu0 0.0
    %76 = vmatpush1.msra.mxu0 0.0
    %77 = vmatprep.subr.mxu0 0.0
    %78 = vmatpush1.msra.mxu0 0.0
    %79 = vmatprep.subr.mxu0 0.0
    %80 = vmatpush1.msra.mxu0 0.0
    %81 = vmatprep.subr.mxu0 0.0
    %82 = vmatpush1.msra.mxu0 0.0
    %83 = vmatprep.subr.mxu0 0.0
    %84 = vmatpush1.msra.mxu0 0.0
    %85 = vmatprep.subr.mxu0 0.0
    %86 = vmatpush1.msra.mxu0 0.0
    %87 = vmatprep.subr.mxu0 0.0
    %88 = vmatpush1.msra.mxu0 0.0
    %89 = vmatprep.subr.mxu0 0.0
    %90 = vmatpush1.msra.mxu0 0.0
    %91 = vmatprep.subr.mxu0 0.0
    %92 = vmatpush1.msra.mxu0 0.0
    %93 = vmatprep.subr.mxu0 0.0
    %94 = vmatpush1.msra.mxu0 0.0
    %95 = vmatprep.subr.mxu0 0.0
    %96 = vmatpush1.msra.mxu0 0.0
    %97 = vmatprep.subr.mxu0 0.0
    %98 = vmatpush1.msra.mxu0 0.0
    %99 = vmatprep.subr.mxu0 0.0
    %100 = vmatpush1.msra.mxu0 0.0
    %101 = vmatprep.subr.mxu0 0.0
    %102 = vmatpush1.msra.mxu0 0.0
    %103 = vmatprep.subr.mxu0 0.0
    %104 = vmatpush1.msra.mxu0 0.0
    %105 = vmatprep.subr.mxu0 0.0
    %106 = vmatpush1.msra.mxu0 0.0
    %107 = vmatprep.subr.mxu0 0.0
    %108 = vmatpush1.msra.mxu0 0.0
    %109 = vmatprep.mubr.f32.mxu0 0.0
    %110 = vmatmul.mubr.f32.gmra.mrb[0].mxu0 %v43
    %v111 = vpop.f32.mrb[0].mxu0
    %v112 = vadd.f32 0.0, %v111
    %v113 = vpop.f32.mrb[0].mxu0
    %114 = vdwg.mxu0
    %v115 = vld [vmem:[%s2] sm:$0x1]
    %v116 = vsub.f32 %v112, %v115
    %v117 = vand.u32 2147483647, %v116
    %vm118 = vcmp.le.f32.partialorder %v117, 0.7853982
    %vm119 = vcmp.lt.s32.totalorder %v116, 0
    %v120 = vand.u32 %v116, 2139095040
    %v121 = vshrl.u32 %v120, 23
    %v122 = vsub.s32 %v121, 127
    %v123 = vand.u32 2147483647, %v116
    %v124 = vand.u32 %v123, 8388607
    %v125 = vor.u32 %v124, 8388608
    %v126 = vsub.s32 0, %v125
    %v127 = vadd.s32 %v122, 1
    %vm128 = vcmp.gt.s32.totalorder %v127, 0
    %v129 = vsel %vm128, %v127, 0
    %v130 = vshrl.u32 %v129, 5
    %v131 = vand.u32 %v129, 31
    %v132 = vsub.s32 32, %v131
    %v133 = vshrl.u32 683565275, %v132
    %v134 = vshll.u32 683565275, %v131
    %v135 = vshrl.u32 2475754826, %v132
    %v136 = vor.u32 %v134, %v135
    %v137 = vshll.u32 2475754826, %v131
    %v138 = vshrl.u32 2131351028, %v132
    %v139 = vor.u32 %v137, %v138
    %v140 = vshll.u32 2131351028, %v131
    %v141 = vshrl.u32 2102212464, %v132
    %v142 = vor.u32 %v140, %v141
    %v143 = vshll.u32 2102212464, %v131
    %v144 = vshrl.u32 920167782, %v132
    %v145 = vor.u32 %v143, %v144
    %v146 = vshll.u32 920167782, %v131
    %v147 = vshrl.u32 1326507024, %v132
    %v148 = vor.u32 %v146, %v147
    %vm149 = vcmp.lt.s32.totalorder %v130, 1
    %vm150 = vcmp.lt.s32.totalorder %v130, 2
    %vm151 = vcmp.lt.s32.totalorder %v130, 3
    %vm152 = vcmp.lt.s32.totalorder %v130, 4
    %v153 = vsel %vm149, %v133, %v136
    %v154 = vsel %vm152, %v142, 2102212464
    %v155 = vsel %vm151, %v139, %v154
    %v156 = vsel %vm150, %v153, %v155
    %v157 = vsel %vm149, %v136, %v139
    %v158 = vsel %vm152, %v145, 920167782
    %v159 = vsel %vm151, %v142, %v158
    %v160 = vsel %vm150, %v157, %v159
    %v161 = vsel %vm149, %v139, %v142
    %v162 = vsel %vm152, %v148, 1326507024
    %v163 = vsel %vm151, %v145, %v162
    %v164 = vsel %vm150, %v161, %v163
    %v165 = vshll.u32 %v125, 8
    %v166 = vmul.u32.u64.compose %v165, %v164
    %v167 = vextract.low.u32 %v166
    %v168 = vextract.high.u32 %v166
    %v169 = vmul.u32.u64.compose %v165, %v160
    %v170 = vextract.low.u32 %v169
    %v171 = vextract.high.u32 %v169
    %v172 = vmul.u32 %v165, %v156
    %v173 = vadd.s32 %v168, %v170
    %vm174 = vc.u32 %v168, %v170
    %v175 = vadd.s32 %v171, 1
    %v176 = vsel %vm174, %v175, %v171
    %v177 = vadd.s32 %v172, %v176
    %v178 = vadd.s32 %v177, 536870912
    %v179 = vshrl.u32 %v178, 30
    %v180 = vshll.u32 %v179, 30
    %v181 = vsub.s32 %v177, %v180
    %vm182 = vcmp.lt.s32.totalorder %v181, 0
    %v183 = vsub.s32 0, %v181
    %v184 = vsel %vm182, %v183, %v181
    %v185 = vclz %v184
    %v186 = vsub.s32 %v185, 2
    %vm187 = vcmp.gt.s32.totalorder 0, %v186
    %v188 = vsel %vm187, 0, %v186
    %v189 = vsub.s32 32, %v188
    %v190 = vshll.u32 %v181, %v188
    %v191 = vshrl.u32 %v173, %v189
    %v192 = vor.u32 %v190, %v191
    %v193 = vsub.s32 4294967266, %v188
    %v194 = vadd.s32 %v193, 127
    %v195 = vshll.u32 %v194, 23
    %v196 = vor.u32 4788187, %v195
    %v197 = vand.u32 2147483647, %v196
    %v199 = vcvt.s32.f32 %v192
    %v200 = vmul.f32 %v199, %v197
    %v201 = vxor.u32 %v200, 2147483648
    %v202 = vsel %vm119, %v201, %v200
    %v203 = vsub.s32 4, %v179
    %v204 = vsel %vm119, %v203, %v179
    %v205 = vsel %vm118, %v116, %v202
    %v206 = vsel %vm118, 0, %v204
    %v207 = vcosq.f32.pop %v205
    %v208 = vsinq.f32.pop %v205
    %vm209 = vweird.f32 %v116
    %v210 = vand.u32 %v206, 3
    %vm211 = vcmp.lt.s32.totalorder %v210, 2
    %vm212 = vcmp.eq.s32.totalorder %v210, 0
    %v213 = vxor.u32 %v208, 2147483648
    %v214 = vsel %vm212, %v207, %v213
    %vm215 = vcmp.eq.s32.totalorder %v210, 2
    %v216 = vxor.u32 %v207, 2147483648
    %v217 = vsel %vm215, %v216, %v208
    %v218 = vsel %vm211, %v214, %v217
    %v219 = vsel %vm209, nan, %v218
    %220 = vst [vmem:[#allocation7] sm:$0x1] %v219
    // Predicated region
    $region22: #{tpu_custom_call.1} parent=1 // pred_check
      _
    $region23: #{tpu_custom_call.1} parent=1 // pred_check_branch
      %222 = sbr.rel (0) target = $region25
    $region24: #{tpu_custom_call.1} parent=1 // pred_region
      %s224 = ssub.s32 16, 16
      %225 = vsyncadd [#allocation4], %s224
      %s227 = sshll.u32 [#allocation7], 4
      %s228 = int_to_ptr.vmem [resolvable:$true] %s227
      %230 = dma.vmem_to_hbm [thread:$0]  %s228, 16, %s3, [#allocation4]
    $region25: #{tpu_custom_call.1} parent=1 // pred_fallthru
      _
    // Predicated region
    $region26: #{tpu_custom_call.1} parent=1 // pred_check
      _
    $region27: #{tpu_custom_call.1} parent=1 // pred_check_branch
      %232 = sbr.rel (0) target = $region29
    $region28: #{tpu_custom_call.1} parent=1 // pred_region
      %233 = dma.done [#allocation4], 16
    $region29: #{tpu_custom_call.1} parent=1 // pred_fallthru
      _
    %234 = vsyncpa [#allocation3], 1
    %235 = vsyncpa [#allocation6], 1
    %236 = vsyncpa [#allocation4], 1

</llo_original>
